<compile_context>
chip_gen: v7x
topology: tpu7x:2x2x1
jax: 0.10.0
libtpu: 0.0.40
codegen_flags: <defaults>
</compile_context>

<pallas_src>
import math

import jax
import jax.numpy as jnp
from jax import lax
from jax.experimental import pallas as pl
from jax.experimental.pallas import tpu as pltpu


def _round_up(x, m):
    return ((x + m - 1) // m) * m


def _gaussian_taps_1d(size, std):
    """Unnormalized 1-D Gaussian taps, identical to the PyTorch __init__ construction."""
    mean = (size - 1) / 2.0
    return [
        (1.0 / (std * math.sqrt(2.0 * math.pi))) * math.exp(-(((float(i) - mean) / std) ** 2) / 2.0)
        for i in range(size)
    ]


def _normalize_params(kernel_size, sigma, stride):
    if isinstance(kernel_size, int):
        kernel_size = (kernel_size, kernel_size)
    if isinstance(sigma, (int, float)):
        sigma = (float(sigma), float(sigma))
    if isinstance(stride, int):
        stride = (stride, stride)
    return tuple(int(k) for k in kernel_size), tuple(float(s) for s in sigma), tuple(int(s) for s in stride)


def _separable_taps(kernel_size, sigma):
    """Normalized 1-D taps (gh, gw) whose outer product equals the torch 2-D kernel exactly.

    torch builds kernel2d[i, j] = gH(i) * gW(j) then divides by its sum; since the sum factors as
    sum(gH) * sum(gW), the normalized 2-D kernel equals (gH/sum(gH)) outer (gW/sum(gW)).
    """
    (kh, kw) = kernel_size
    gh_un = _gaussian_taps_1d(kh, sigma[0])
    gw_un = _gaussian_taps_1d(kw, sigma[1])
    sh_sum, sw_sum = sum(gh_un), sum(gw_un)
    return [v / sh_sum for v in gh_un], [v / sw_sum for v in gw_un]


def _make_kernel(gh, gw, oh, ow):
    """Separable depthwise Gaussian, stride-1 valid conv.

    Block layout: x_ref (c_blk, H, W), o_ref (c_blk, OH, OW) — W on lanes, H on sublanes, C leading.
    Vertical pass uses sublane-offset Ref slices; horizontal pass uses static lane slices of the
    f32 value (XLU realignment, hidden under the HBM-bound DMA).
    """
    kh, kw = len(gh), len(gw)

    def kernel(x_ref, o_ref):
        # --- vertical (H) pass: acc[c, r, x] = sum_ki gh[ki] * in[c, r + ki, x] ---
        acc = gh[0] * x_ref[:, pl.ds(0, oh), :].astype(jnp.float32)
        for ki in range(1, kh):
            acc = acc + gh[ki] * x_ref[:, pl.ds(ki, oh), :].astype(jnp.float32)
        # --- horizontal (W) pass: out[c, r, x] = sum_kj gw[kj] * acc[c, r, x + kj] ---
        out = gw[0] * acc[:, :, 0:ow]
        for kj in range(1, kw):
            out = out + gw[kj] * acc[:, :, kj:kj + ow]
        o_ref[...] = out.astype(o_ref.dtype)

    return kernel


def _vmem_budget_bytes():
    """Per-generation scoped-VMEM cap: ~3/4 of physical VMEM, never above 100 MiB."""
    try:
        phys = int(pltpu.get_tpu_info().vmem_capacity_bytes)
    except Exception:
        phys = 64 << 20  # conservative fallback (v7x-sized)
    return int(min(100 << 20, (phys * 3) // 4))


def _pick_c_block(c, h, w, oh, ow, itemsize, budget):
    """Largest channel-block (divisor of C) whose pipelined VMEM footprint fits the budget."""

    def need(cb):
        rs = lambda v: _round_up(max(v, 1), 16)    # sublane padding (covers f32 and packed dtypes)
        rl = lambda v: _round_up(max(v, 1), 128)   # lane padding
        in_b = cb * rs(h) * rl(w) * itemsize
        out_b = cb * rs(oh) * rl(ow) * itemsize
        tmp_b = 3 * cb * rs(oh) * rl(w) * 4        # elementwise f32 temporaries (acc/out slabs)
        return 2 * (in_b + out_b) + tmp_b          # in/out are double-buffered by the pipeline

    best = 1
    for cb in range(1, c + 1):
        if c % cb == 0 and need(cb) + (4 << 20) <= budget:
            best = cb
    return best, need(best)


def gaussian_smoothing(x, kernel_size=3, sigma=1.0, stride=1):
    """Depthwise Gaussian smoothing of an NCHW tensor (padding=0), matching the PyTorch forward."""
    (kh, kw), sigma, (sh, sw) = _normalize_params(kernel_size, sigma, stride)
    gh, gw = _separable_taps((kh, kw), sigma)

    n, c, h, w = x.shape
    oh_full = h - kh + 1   # stride-1 valid-conv output; strided output is a subsample of it
    ow_full = w - kw + 1

    itemsize = jnp.dtype(x.dtype).itemsize
    budget = _vmem_budget_bytes()
    c_blk, vmem_need = _pick_c_block(c, h, w, oh_full, ow_full, itemsize, budget)
    vmem_limit = int(min(budget, max(vmem_need + (8 << 20), 32 << 20)))

    kernel = _make_kernel(gh, gw, oh_full, ow_full)

    cost = pl.CostEstimate(
        flops=int(2 * (kh + kw) * n * c * oh_full * w),
        transcendentals=0,
        bytes_accessed=int(n * c * (h * w + oh_full * ow_full) * itemsize),
    )

    out_full = pl.pallas_call(
        kernel,
        out_shape=jax.ShapeDtypeStruct((n, c, oh_full, ow_full), x.dtype),
        grid=(n, c // c_blk),
        in_specs=[pl.BlockSpec((None, c_blk, h, w), lambda i, j: (i, j, 0, 0))],
        out_specs=pl.BlockSpec((None, c_blk, oh_full, ow_full), lambda i, j: (i, j, 0, 0)),
        compiler_params=pltpu.CompilerParams(
            dimension_semantics=("parallel", "parallel"),
            vmem_limit_bytes=vmem_limit,
        ),
        cost_estimate=cost,
    )(x)

    if sh == 1 and sw == 1:
        return out_full
    # Strided conv (padding=0) == stride-1 conv subsampled at the stride phase 0.
    return out_full[:, :, ::sh, ::sw]


def _reference(x, kernel_size=3, sigma=1.0, stride=1):
    """Pure-JAX reference: depthwise conv with the same deterministic Gaussian weights."""
    (kh, kw), sigma, stride = _normalize_params(kernel_size, sigma, stride)
    gh, gw = _separable_taps((kh, kw), sigma)
    taps = jnp.asarray([[gh[i] * gw[j] for j in range(kw)] for i in range(kh)], dtype=x.dtype)
    c = x.shape[1]
    weight = jnp.tile(taps[None, None], (c, 1, 1, 1))  # (C, 1, kh, kw), like the torch buffer
    return lax.conv_general_dilated(
        x,
        weight,
        window_strides=stride,
        padding="VALID",
        dimension_numbers=("NCHW", "OIHW", "NCHW"),
        feature_group_count=c,
    )


if __name__ == "__main__":
    key = jax.random.PRNGKey(0)
    N, C, H, W = 2, 4, 16, 16
    KERNEL_SIZE, SIGMA = 3, 1.0

    x = jax.random.normal(key, (N, C, H, W), dtype=jnp.float32)

    for STRIDE in (1, 2):
        out = gaussian_smoothing(x, kernel_size=KERNEL_SIZE, sigma=SIGMA, stride=STRIDE)
        out = jax.block_until_ready(out)
        ref = jax.block_until_ready(_reference(x, KERNEL_SIZE, SIGMA, STRIDE))
        expected_hw = (H - KERNEL_SIZE) // STRIDE + 1
        assert out.shape == (N, C, expected_hw, expected_hw), (STRIDE, out.shape)
        assert out.shape == ref.shape, (out.shape, ref.shape)
        err = float(jnp.max(jnp.abs(out - ref)))
        assert jnp.allclose(out, ref, atol=1e-5, rtol=1e-5), (STRIDE, err)

    print("KERNEL_OK")
</pallas_src>

<mosaic_0001>
module attributes {stable_mosaic.version = 11 : i64} {
  func.func @kernel(%arg0: i32, %arg1: i32, %arg2: memref<1x4x16x16xf32, #tpu.memory_space<vmem>>, %arg3: memref<1x4x14x14xf32, #tpu.memory_space<vmem>>) attributes {dimension_semantics = [#tpu.dimension_semantics<parallel>, #tpu.dimension_semantics<parallel>], iteration_bounds = array<i64: 2, 1>, scalar_prefetch = 0 : i64, scratch_operands = 0 : i64, tpu.core_type = #tpu.core_type<tc>, window_params = [{transform_indices = @transform_0, window_bounds = array<i64: 1, 4, 16, 16>}, {transform_indices = @transform_1, window_bounds = array<i64: 1, 4, 14, 14>}]} {
    %c0 = arith.constant 0 : index
    %c0_0 = arith.constant 0 : index
    %c0_1 = arith.constant 0 : index
    %c0_2 = arith.constant 0 : index
    %0 = vector.load %arg2[%c0, %c0_0, %c0_1, %c0_2] : memref<1x4x16x16xf32, #tpu.memory_space<vmem>>, vector<1x4x14x16xf32>
    %1 = vector.shape_cast %0 : vector<1x4x14x16xf32> to vector<4x14x16xf32>
    %cst = arith.constant 0.274068624 : f32
    %2 = vector.broadcast %cst : f32 to vector<4x14x16xf32>
    %3 = arith.mulf %2, %1 : vector<4x14x16xf32>
    %c0_3 = arith.constant 0 : index
    %c0_4 = arith.constant 0 : index
    %c1 = arith.constant 1 : index
    %c0_5 = arith.constant 0 : index
    %4 = vector.load %arg2[%c0_3, %c0_4, %c1, %c0_5] : memref<1x4x16x16xf32, #tpu.memory_space<vmem>>, vector<1x4x14x16xf32>
    %5 = vector.shape_cast %4 : vector<1x4x14x16xf32> to vector<4x14x16xf32>
    %cst_6 = arith.constant 0.451862752 : f32
    %6 = vector.broadcast %cst_6 : f32 to vector<4x14x16xf32>
    %7 = arith.mulf %6, %5 : vector<4x14x16xf32>
    %8 = arith.addf %3, %7 : vector<4x14x16xf32>
    %c0_7 = arith.constant 0 : index
    %c0_8 = arith.constant 0 : index
    %c2 = arith.constant 2 : index
    %c0_9 = arith.constant 0 : index
    %9 = vector.load %arg2[%c0_7, %c0_8, %c2, %c0_9] : memref<1x4x16x16xf32, #tpu.memory_space<vmem>>, vector<1x4x14x16xf32>
    %10 = vector.shape_cast %9 : vector<1x4x14x16xf32> to vector<4x14x16xf32>
    %cst_10 = arith.constant 0.274068624 : f32
    %11 = vector.broadcast %cst_10 : f32 to vector<4x14x16xf32>
    %12 = arith.mulf %11, %10 : vector<4x14x16xf32>
    %13 = arith.addf %8, %12 : vector<4x14x16xf32>
    %14 = vector.extract_strided_slice %13 {offsets = [0, 0, 0], sizes = [4, 14, 14], strides = [1, 1, 1]} : vector<4x14x16xf32> to vector<4x14x14xf32>
    %cst_11 = arith.constant 0.274068624 : f32
    %15 = vector.broadcast %cst_11 : f32 to vector<4x14x14xf32>
    %16 = arith.mulf %15, %14 : vector<4x14x14xf32>
    %17 = vector.extract_strided_slice %13 {offsets = [0, 0, 1], sizes = [4, 14, 14], strides = [1, 1, 1]} : vector<4x14x16xf32> to vector<4x14x14xf32>
    %cst_12 = arith.constant 0.451862752 : f32
    %18 = vector.broadcast %cst_12 : f32 to vector<4x14x14xf32>
    %19 = arith.mulf %18, %17 : vector<4x14x14xf32>
    %20 = arith.addf %16, %19 : vector<4x14x14xf32>
    %21 = vector.extract_strided_slice %13 {offsets = [0, 0, 2], sizes = [4, 14, 14], strides = [1, 1, 1]} : vector<4x14x16xf32> to vector<4x14x14xf32>
    %cst_13 = arith.constant 0.274068624 : f32
    %22 = vector.broadcast %cst_13 : f32 to vector<4x14x14xf32>
    %23 = arith.mulf %22, %21 : vector<4x14x14xf32>
    %24 = arith.addf %20, %23 : vector<4x14x14xf32>
    %c0_14 = arith.constant 0 : index
    %c0_15 = arith.constant 0 : index
    %c0_16 = arith.constant 0 : index
    %c0_17 = arith.constant 0 : index
    %25 = vector.load %arg3[%c0_14, %c0_15, %c0_16, %c0_17] : memref<1x4x14x14xf32, #tpu.memory_space<vmem>>, vector<1x4x14x14xf32>
    %26 = vector.shape_cast %25 : vector<1x4x14x14xf32> to vector<4x14x14xf32>
    %27 = vector.shape_cast %24 : vector<4x14x14xf32> to vector<1x4x14x14xf32>
    tpu.vector_store %arg3[%c0_14, %c0_15, %c0_16, %c0_17], %27 {strides = array<i32>} : memref<1x4x14x14xf32, #tpu.memory_space<vmem>>, vector<1x4x14x14xf32>,
    return
  }
  func.func @transform_0(%arg0: i32, %arg1: i32) -> (i32, i32, i32, i32) {
    %c0_i32 = arith.constant 0 : i32
    %c0_i32_0 = arith.constant 0 : i32
    %c0_i32_1 = arith.constant 0 : i32
    return %arg0, %arg1, %c0_i32, %c0_i32_0 : i32, i32, i32, i32
  }
  func.func @transform_1(%arg0: i32, %arg1: i32) -> (i32, i32, i32, i32) {
    %c0_i32 = arith.constant 0 : i32
    %c0_i32_0 = arith.constant 0 : i32
    %c0_i32_1 = arith.constant 0 : i32
    return %arg0, %arg1, %c0_i32, %c0_i32_0 : i32, i32, i32, i32
  }
}

</mosaic_0001>

<llo_original>
// kernel: tpu_custom_call.1
$region0: #{tpu_custom_call.1}
  #allocation0 [shape = 'u32[]', space=smem, size = 0x4, offset = 0x4, fixed_abs, tag = 'smem constant byte address 0x4 - core index']
  #allocation1 [shape = 'u32[144,128]{1,0:T(1,128)}', space=vmem, size = 0x12000, scoped, tag = 'internal scratch']
  %s0 = inlined_call_operand.hbm [shape: f32[2,4,16,16], index: 0, kind: input, shape index: {}]
  %s1 = inlined_call_operand.vmem [shape: f32[2,4,14,14], index: 1, kind: output, shape index: {}]
  %s2 = sld [smem:[#allocation0]]
  $region41: #{tpu_custom_call.1} parent=0
    _
  %s4 = ssub.s32 1, %s2
  %s5 = scalar_select 0, %s4, %s2
  $region1: #{tpu_custom_call.1} parent=0
    #allocation2 [shape = 'u8[65536]{0}', space=vmem, size = 0x10000, scoped, tag = 'input window, operand 0']
    #allocation3 [shape = 's32[2]{0}', space=sflag, size = 0x8, scoped, tag = 'scoped memory for tpu_custom_call.1']
    %6 = vsyncpa [#allocation3], 0
    %s7 = scalar_lea.sflag [#allocation3], 1
    %8 = vsyncpa %s7, 0
    loop: start=0, step=1, limit=4
    $region2: #{tpu_custom_call.1} parent=1 // loop_pre_header
      _
    $region3: #{tpu_custom_call.1} parent=1 // loop_header
      %s10 = sphi 0, %s14
      %p11 = scmp.ge.s32.totalorder %s10, 4
      %s17 = sphi 0, %s29
      %s18 = sphi 0, %s25
      %s19 = sphi 0, %s17
      %s20 = sphi 0, %s18
      %s21 = sphi 0, %s19
      %s22 = sphi 0, %s20
      %s34 = sphi 0, %s36
      %s37 = sphi 0, %s34
      %s38 = sphi 0, %s37
      %s54 = sphi 0, %s38
      %s62 = sphi 0, %s64
      %s65 = sphi 0, %s62
      %s66 = sphi 0, %s65
      %s82 = sphi 0, %s66
    $region4: #{tpu_custom_call.1} parent=1 // loop_header_branch
      %13 = sbr.rel (%p11) target = $region8
    $region5: #{tpu_custom_call.1} parent=1 // loop_body
      %s15 = ssub.s32 %s10, 1
      %s16 = ssub.s32 %s10, 2
      %s23 = sadd.s32 1, %s18
      %p24 = scmp.ge.s32.totalorder %s23, 1
      %s25 = scalar_select %p24, 0, %s23
      %s26 = sadd.s32 1, %s17
      %s27 = scalar_select %p24, %s26, %s17
      %p28 = scmp.ge.s32.totalorder %s27, 2
      %s29 = scalar_select %p28, 0, %s27
      %s30 = ssub.s32 %s17, %s29
      %s31 = ssub.s32 %s18, %s25
      %s32 = sor.u32 %s30, %s31
      %p33 = scmp.eq.s32.totalorder %s32, 0
      %s35 = sadd.s32 %s34, 1
      %s36 = scalar_select %p33, %s34, %s35
      %p39 = pneg %p33
      %p40 = scmp.eq.s32.totalorder %s10, 1
      %p41 = por %p39, %p40
      %p42 = scmp.ne.s32.totalorder %s34, %s37
      %p43 = scmp.eq.s32.totalorder %s10, 0
      %p44 = por %p42, %p43
      %p45 = scmp.ne.s32.totalorder %s34, %s37
      %p46 = scmp.eq.s32.totalorder %s15, 1
      %p47 = por %p45, %p46
      %p48 = scmp.ne.s32.totalorder %s37, %s38
      %p49 = scmp.eq.s32.totalorder %s15, 0
      %p50 = por %p48, %p49
      %p51 = scmp.ne.s32.totalorder %s37, %s38
      %p52 = scmp.eq.s32.totalorder %s16, 1
      %p53 = por %p51, %p52
      %p55 = scmp.ne.s32.totalorder %s38, %s54
      %p56 = scmp.eq.s32.totalorder %s16, 0
      %p57 = por %p55, %p56
      %s58 = ssub.s32 %s17, %s29
      %s59 = ssub.s32 %s18, %s25
      %s60 = sor.u32 %s58, %s59
      %p61 = scmp.eq.s32.totalorder %s60, 0
      %s63 = sadd.s32 %s62, 1
      %s64 = scalar_select %p61, %s62, %s63
      %p67 = pneg %p61
      %p68 = scmp.eq.s32.totalorder %s10, 1
      %p69 = por %p67, %p68
      %p70 = scmp.ne.s32.totalorder %s62, %s65
      %p71 = scmp.eq.s32.totalorder %s10, 0
      %p72 = por %p70, %p71
      %p73 = scmp.ne.s32.totalorder %s62, %s65
      %p74 = scmp.eq.s32.totalorder %s15, 1
      %p75 = por %p73, %p74
      %p76 = scmp.ne.s32.totalorder %s65, %s66
      %p77 = scmp.eq.s32.totalorder %s15, 0
      %p78 = por %p76, %p77
      %p79 = scmp.ne.s32.totalorder %s65, %s66
      %p80 = scmp.eq.s32.totalorder %s16, 1
      %p81 = por %p79, %p80
      %p83 = scmp.ne.s32.totalorder %s66, %s82
      %p84 = scmp.eq.s32.totalorder %s16, 0
      %p85 = por %p83, %p84
      %p86 = scmp.le.s32.totalorder 1, %s10
      %p87 = scmp.lt.s32.totalorder %s10, 3
      %p88 = pnand %p86, %p87
      %p89 = pneg %p88
      // Predicated region
      $region9: #{tpu_custom_call.1} parent=5 // pred_check
        _
      $region10: #{tpu_custom_call.1} parent=5 // pred_check_branch
        %91 = sbr.rel (%p88) target = $region12
      $region11: #{tpu_custom_call.1} parent=5 // pred_region
        %s92 = ssub.s32 %s10, 1
      $region12: #{tpu_custom_call.1} parent=5 // pred_fallthru
        _
      %p93 = scmp.lt.s32.totalorder %s10, 2
      // Predicated region
      $region13: #{tpu_custom_call.1} parent=5 // pred_check
        %p94 = pneg %p93
      $region14: #{tpu_custom_call.1} parent=5 // pred_check_branch
        %96 = sbr.rel (%p94) target = $region16
      $region15: #{tpu_custom_call.1} parent=5 // pred_region
        // Predicated region
        $region17: #{tpu_custom_call.1} parent=15 // pred_check
          %p97 = pneg %p44
        $region18: #{tpu_custom_call.1} parent=15 // pred_check_branch
          %99 = sbr.rel (%p97) target = $region20
        $region19: #{tpu_custom_call.1} parent=15 // pred_region
          %s100 = sand.u32 %s34, 1
          %s101 = scalar_lea.sflag [#allocation3], %s100
          %s102 = sand.u32 %s34, 1
          %s103 = smul.addr %s102, 64
          %s104 = scalar_lea.vmem [#allocation2], %s103
          %s105 = smul.u32 4, %s18
          %s107 = ssub.s32 1024, 1024
          %108 = vsyncadd %s101, %s107
          %s109 = smul.addr %s105, 2
          %s110 = smul.addr %s17, 8
          %s111 = sadd.s32 %s109, %s110
          %s112 = smul.addr %s111, 128
          %s113 = scalar_lea.hbm %s0, %s112
          %s114 = sshll.u32 %s104, 4
          %s115 = int_to_ptr.vmem [resolvable:$true] %s114
          %120 = dma.hbm_to_vmem [thread:$0]  %s113, 1024, %s115, %s101, 128, 128, 8
        $region20: #{tpu_custom_call.1} parent=15 // pred_fallthru
          _
      $region16: #{tpu_custom_call.1} parent=5 // pred_fallthru
        _
      %p121 = scmp.le.s32.totalorder 1, %s10
      %p122 = scmp.lt.s32.totalorder %s10, 3
      %p123 = pnand %p121, %p122
      %p124 = pneg %p123
      // Predicated region
      $region21: #{tpu_custom_call.1} parent=5 // pred_check
        _
      $region22: #{tpu_custom_call.1} parent=5 // pred_check_branch
        %126 = sbr.rel (%p123) target = $region24
      $region23: #{tpu_custom_call.1} parent=5 // pred_region
        %s127 = ssub.s32 %s10, 1
        %s128 = sand.u32 %s37, 1
        %s129 = scalar_lea.sflag [#allocation3], %s128
        %s130 = sand.u32 %s37, 1
        %s131 = smul.addr %s130, 64
        %s132 = scalar_lea.vmem [#allocation2], %s131
        // Predicated region
        $region25: #{tpu_custom_call.1} parent=23 // pred_check
          %p133 = pneg %p50
        $region26: #{tpu_custom_call.1} parent=23 // pred_check_branch
          %135 = sbr.rel (%p133) target = $region28
        $region27: #{tpu_custom_call.1} parent=23 // pred_region
          %136 = dma.done %s129, 1024
        $region28: #{tpu_custom_call.1} parent=23 // pred_fallthru
          _
        %s137 = sand.u32 %s37, 1
        %s138 = scalar_lea.sflag [#allocation3], %s137
        %s139 = sand.u32 %s37, 1
        %s140 = smul.addr %s139, 64
        %s141 = scalar_lea.vmem [#allocation2], %s140
        %p142 = pneg %p50
        %p143 = pneg %p47
        %p144 = pneg %p78
        %p145 = pneg %p75
        %s146 = smul.u32 4, %s20
        %p147 = scmp.lt.s32.totalorder %s19, 1
        %s148 = scalar_select %p147, %s19, 1
        %p149 = scmp.lt.s32.totalorder %s146, 3
        %s150 = scalar_select %p149, %s146, 3
        %s151 = smul.addr %s150, 2
        %s152 = smul.addr %s148, 8
        %s153 = sadd.s32 %s151, %s152
        %s154 = smul.addr %s153, 8
        %s155 = scalar_lea.vmem %s1, %s154
        %s156 = smul.u32 4, %s20
        %s157 = smul.u32 4, %s20
        %p158 = scmp.lt.s32.totalorder %s19, 1
        %s159 = scalar_select %p158, %s19, 1
        %p160 = scmp.lt.s32.totalorder %s157, 3
        %s161 = scalar_select %p160, %s157, 3
        %s162 = smul.addr %s161, 2
        %s163 = smul.addr %s159, 8
        %s164 = sadd.s32 %s162, %s163
        %s165 = smul.addr %s164, 8
        %s166 = scalar_lea.vmem %s1, %s165
        %s167 = smul.u32 4, %s20
        %v168 = vld [vmem:[%s132] sm:$0xff]
        %v169 = vld [vmem:[%s132 + $0x8] sm:$0x3f]
        %v170 = vld [vmem:[%s132 + $0x10] sm:$0xff]
        %v171 = vld [vmem:[%s132 + $0x18] sm:$0x3f]
        %v172 = vld [vmem:[%s132 + $0x20] sm:$0xff]
        %v173 = vld [vmem:[%s132 + $0x28] sm:$0x3f]
        %v174 = vld [vmem:[%s132 + $0x30] sm:$0xff]
        %v175 = vld [vmem:[%s132 + $0x38] sm:$0x3f]
        %v176 = vmul.f32 %v168, 0.27406862
        %v177 = vmul.f32 %v169, 0.27406862
        %v178 = vmul.f32 %v170, 0.27406862
        %v179 = vmul.f32 %v171, 0.27406862
        %v180 = vmul.f32 %v172, 0.27406862
        %v181 = vmul.f32 %v173, 0.27406862
        %v182 = vmul.f32 %v174, 0.27406862
        %v183 = vmul.f32 %v175, 0.27406862
        %v184 = vld [vmem:[%s132 + $0x1] sm:$0xff]
        %v185 = vld [vmem:[%s132 + $0x9] sm:$0x3f]
        %v186 = vld [vmem:[%s132 + $0x11] sm:$0xff]
        %v187 = vld [vmem:[%s132 + $0x19] sm:$0x3f]
        %v188 = vld [vmem:[%s132 + $0x21] sm:$0xff]
        %v189 = vld [vmem:[%s132 + $0x29] sm:$0x3f]
        %v190 = vld [vmem:[%s132 + $0x31] sm:$0xff]
        %v191 = vld [vmem:[%s132 + $0x39] sm:$0x3f]
        %v192 = vmul.f32 %v184, 0.45186275
        %v193 = vmul.f32 %v185, 0.45186275
        %v194 = vmul.f32 %v186, 0.45186275
        %v195 = vmul.f32 %v187, 0.45186275
        %v196 = vmul.f32 %v188, 0.45186275
        %v197 = vmul.f32 %v189, 0.45186275
        %v198 = vmul.f32 %v190, 0.45186275
        %v199 = vmul.f32 %v191, 0.45186275
        %v200 = vadd.f32 %v176, %v192
        %v201 = vadd.f32 %v177, %v193
        %v202 = vadd.f32 %v178, %v194
        %v203 = vadd.f32 %v179, %v195
        %v204 = vadd.f32 %v180, %v196
        %v205 = vadd.f32 %v181, %v197
        %v206 = vadd.f32 %v182, %v198
        %v207 = vadd.f32 %v183, %v199
        %v208 = vld [vmem:[%s132 + $0x2] sm:$0xff]
        %v209 = vld [vmem:[%s132 + $0xa] sm:$0x3f]
        %v210 = vld [vmem:[%s132 + $0x12] sm:$0xff]
        %v211 = vld [vmem:[%s132 + $0x1a] sm:$0x3f]
        %v212 = vld [vmem:[%s132 + $0x22] sm:$0xff]
        %v213 = vld [vmem:[%s132 + $0x2a] sm:$0x3f]
        %v214 = vld [vmem:[%s132 + $0x32] sm:$0xff]
        %v215 = vld [vmem:[%s132 + $0x3a] sm:$0x3f]
        %v216 = vmul.f32 %v208, 0.27406862
        %v217 = vmul.f32 %v209, 0.27406862
        %v218 = vmul.f32 %v210, 0.27406862
        %v219 = vmul.f32 %v211, 0.27406862
        %v220 = vmul.f32 %v212, 0.27406862
        %v221 = vmul.f32 %v213, 0.27406862
        %v222 = vmul.f32 %v214, 0.27406862
        %v223 = vmul.f32 %v215, 0.27406862
        %v224 = vadd.f32 %v200, %v216
        %v225 = vadd.f32 %v201, %v217
        %v226 = vadd.f32 %v202, %v218
        %v227 = vadd.f32 %v203, %v219
        %v228 = vadd.f32 %v204, %v220
        %v229 = vadd.f32 %v205, %v221
        %v230 = vadd.f32 %v206, %v222
        %v231 = vadd.f32 %v207, %v223
        %v232 = vmul.f32 %v224, 0.27406862
        %v233 = vmul.f32 %v225, 0.27406862
        %v234 = vmul.f32 %v226, 0.27406862
        %v235 = vmul.f32 %v227, 0.27406862
        %v236 = vmul.f32 %v228, 0.27406862
        %v237 = vmul.f32 %v229, 0.27406862
        %v238 = vmul.f32 %v230, 0.27406862
        %v239 = vmul.f32 %v231, 0.27406862
        %v240 = vmul.f32 %v224, 0.45186275
        %v241 = vmul.f32 %v225, 0.45186275
        %v242 = vmul.f32 %v226, 0.45186275
        %v243 = vmul.f32 %v227, 0.45186275
        %v244 = vmul.f32 %v228, 0.45186275
        %v245 = vmul.f32 %v229, 0.45186275
        %v246 = vmul.f32 %v230, 0.45186275
        %v247 = vmul.f32 %v231, 0.45186275
        %256 = vrot.lane.b32.xlu0 %v240, 127
        %v257 = vpop.permute.xlu0 %256
        %258 = vrot.lane.b32.xlu0 %v241, 127
        %v259 = vpop.permute.xlu0 %258
        %260 = vrot.lane.b32.xlu0 %v242, 127
        %v261 = vpop.permute.xlu0 %260
        %262 = vrot.lane.b32.xlu0 %v243, 127
        %v263 = vpop.permute.xlu0 %262
        %264 = vrot.lane.b32.xlu0 %v244, 127
        %v265 = vpop.permute.xlu0 %264
        %266 = vrot.lane.b32.xlu0 %v245, 127
        %v267 = vpop.permute.xlu0 %266
        %268 = vrot.lane.b32.xlu0 %v246, 127
        %v269 = vpop.permute.xlu0 %268
        %270 = vrot.lane.b32.xlu0 %v247, 127
        %v271 = vpop.permute.xlu0 %270
        %v280 = vadd.f32 %v232, %v257
        %v281 = vadd.f32 %v233, %v259
        %v282 = vadd.f32 %v234, %v261
        %v283 = vadd.f32 %v235, %v263
        %v284 = vadd.f32 %v236, %v265
        %v285 = vadd.f32 %v237, %v267
        %v286 = vadd.f32 %v238, %v269
        %v287 = vadd.f32 %v239, %v271
        %296 = vrot.lane.b32.xlu0 %v232, 126
        %v297 = vpop.permute.xlu0 %296
        %298 = vrot.lane.b32.xlu0 %v233, 126
        %v299 = vpop.permute.xlu0 %298
        %300 = vrot.lane.b32.xlu0 %v234, 126
        %v301 = vpop.permute.xlu0 %300
        %302 = vrot.lane.b32.xlu0 %v235, 126
        %v303 = vpop.permute.xlu0 %302
        %304 = vrot.lane.b32.xlu0 %v236, 126
        %v305 = vpop.permute.xlu0 %304
        %306 = vrot.lane.b32.xlu0 %v237, 126
        %v307 = vpop.permute.xlu0 %306
        %308 = vrot.lane.b32.xlu0 %v238, 126
        %v309 = vpop.permute.xlu0 %308
        %310 = vrot.lane.b32.xlu0 %v239, 126
        %v311 = vpop.permute.xlu0 %310
        %v320 = vadd.f32 %v280, %v297
        %v321 = vadd.f32 %v281, %v299
        %v322 = vadd.f32 %v282, %v301
        %v323 = vadd.f32 %v283, %v303
        %v324 = vadd.f32 %v284, %v305
        %v325 = vadd.f32 %v285, %v307
        %v326 = vadd.f32 %v286, %v309
        %v327 = vadd.f32 %v287, %v311
        %vm328 = vcmask 113664
        %329 = vst.msk [vmem:[%s166] sm:$0xff] %vm328, %v320
        %vm330 = vcmask 111616
        %331 = vst.msk [vmem:[%s166 + $0x8] sm:$0x3f] %vm330, %v321
        %332 = vst.msk [vmem:[%s166 + $0x10] sm:$0xff] %vm328, %v322
        %333 = vst.msk [vmem:[%s166 + $0x18] sm:$0x3f] %vm330, %v323
        %334 = vst.msk [vmem:[%s166 + $0x20] sm:$0xff] %vm328, %v324
        %335 = vst.msk [vmem:[%s166 + $0x28] sm:$0x3f] %vm330, %v325
        %336 = vst.msk [vmem:[%s166 + $0x30] sm:$0xff] %vm328, %v326
        %337 = vst.msk [vmem:[%s166 + $0x38] sm:$0x3f] %vm330, %v327
        %s338 = smul.u32 4, %s20
        %p339 = scmp.lt.s32.totalorder %s19, 1
        %s340 = scalar_select %p339, %s19, 1
        %p341 = scmp.lt.s32.totalorder %s338, 3
        %s342 = scalar_select %p341, %s338, 3
        %s343 = smul.addr %s342, 2
        %s344 = smul.addr %s340, 8
        %s345 = sadd.s32 %s343, %s344
        %s346 = smul.addr %s345, 8
        %s347 = scalar_lea.vmem %s1, %s346
        // Predicated region
        $region29: #{tpu_custom_call.1} parent=23 // pred_check
          %p348 = pneg %p75
        $region30: #{tpu_custom_call.1} parent=23 // pred_check_branch
          %350 = sbr.rel (%p348) target = $region32
        $region31: #{tpu_custom_call.1} parent=23 // pred_region
          %s351 = smul.u32 4, %s20
        $region32: #{tpu_custom_call.1} parent=23 // pred_fallthru
          _
      $region24: #{tpu_custom_call.1} parent=5 // pred_fallthru
        _
      %p352 = scmp.le.s32.totalorder 2, %s10
      // Predicated region
      $region33: #{tpu_custom_call.1} parent=5 // pred_check
        %p353 = pneg %p352
      $region34: #{tpu_custom_call.1} parent=5 // pred_check_branch
        %355 = sbr.rel (%p353) target = $region36
      $region35: #{tpu_custom_call.1} parent=5 // pred_region
        %s356 = ssub.s32 %s10, 2
        // Predicated region
        $region37: #{tpu_custom_call.1} parent=35 // pred_check
          %p357 = pneg %p81
        $region38: #{tpu_custom_call.1} parent=35 // pred_check_branch
          %359 = sbr.rel (%p357) target = $region40
        $region39: #{tpu_custom_call.1} parent=35 // pred_region
          %s360 = smul.u32 4, %s22
          %p361 = scmp.lt.s32.totalorder %s21, 1
          %s362 = scalar_select %p361, %s21, 1
          %p363 = scmp.lt.s32.totalorder %s360, 3
          %s364 = scalar_select %p363, %s360, 3
          %s365 = smul.addr %s364, 2
          %s366 = smul.addr %s362, 8
          %s367 = sadd.s32 %s365, %s366
          %s368 = smul.addr %s367, 8
          %s369 = scalar_lea.vmem %s1, %s368
        $region40: #{tpu_custom_call.1} parent=35 // pred_fallthru
          _
      $region36: #{tpu_custom_call.1} parent=5 // pred_fallthru
        _
    $region6: #{tpu_custom_call.1} parent=1 // loop_footer
      %s14 = sadd.s32 1, %s10
    $region7: #{tpu_custom_call.1} parent=1 // loop_footer_branch
      %9 = sbr.rel target = $region3
    $region8: #{tpu_custom_call.1} parent=1 // loop_exit
      _
    %370 = vsyncpa [#allocation3], 1
    %s371 = scalar_lea.sflag [#allocation3], 1
    %372 = vsyncpa %s371, 1

</llo_original>
